<compile_context>
chip_gen: v7x
topology: tpu7x:2x2x1
jax: 0.10.0
libtpu: 0.0.40
codegen_flags: <defaults>
</compile_context>

<pallas_src>
import jax
import jax.numpy as jnp
from jax import lax
from jax.experimental import pallas as pl
from jax.experimental.pallas import tpu as pltpu

EPS = 1e-5


def _layernorm_kernel(x_ref, gamma_ref, beta_ref, o_ref):
    # x_ref: (TILE_B, C, TILE_S) block -> normalize each (b, :, s) column over C.
    x = x_ref[...].astype(jnp.float32)                       # (TB, C, TS)
    mean = jnp.mean(x, axis=1, keepdims=True)                # (TB, 1, TS)
    xc = x - mean
    var = jnp.mean(xc * xc, axis=1, keepdims=True)           # biased variance (PyTorch LayerNorm)
    var = jnp.maximum(var, 0.0)                              # cheap guard (VPU has slack)
    inv_std = lax.rsqrt(var + EPS)                           # EUP slot
    gamma = gamma_ref[...].astype(jnp.float32)               # (C, 1) -> broadcasts over TB and lanes
    beta = beta_ref[...].astype(jnp.float32)                 # (C, 1)
    o_ref[...] = (xc * inv_std * gamma + beta).astype(o_ref.dtype)


def _round_up(a, b):
    return ((a + b - 1) // b) * b


def _largest_divisor_le(n, k):
    k = max(1, min(n, k))
    for d in range(k, 0, -1):
        if n % d == 0:
            return d
    return 1


def _vmem_budget():
    """(target_tile_bytes, vmem_limit_bytes), generation-aware with a safe fallback."""
    try:
        cap = pltpu.get_tpu_info().vmem_capacity_bytes
    except Exception:
        cap = None
    if cap is not None and cap >= 100 * 1024 * 1024:
        # v5e / v6e: 128 MiB physical VMEM.
        return 8 * 1024 * 1024, 96 * 1024 * 1024
    # v7x (64 MiB per TC) or unknown: stay conservative.
    return 4 * 1024 * 1024, 48 * 1024 * 1024


@jax.jit
def layernorm_nd(x_nchw, gamma, beta):
    """LayerNorm over the channel axis of a (B, C, *spatial) tensor."""
    orig_shape = x_nchw.shape
    B, C = orig_shape[0], orig_shape[1]
    # Free, contiguous reshape: (B, C, spatial...) -> (B, C, S).
    x = x_nchw.reshape(B, C, -1)
    S = x.shape[2]

    target_tile_bytes, vmem_limit = _vmem_budget()
    itemsize = jnp.dtype(x.dtype).itemsize
    sublane_mult = max(8, 32 // itemsize)          # 8 (f32), 16 (bf16), 32 (int8/fp8)
    c_phys = _round_up(C, sublane_mult)            # physical sublane-padded channel extent
    bytes_per_col = c_phys * itemsize              # per batch element per lane column

    # Lane-dense spatial tile sized to the per-step budget, capped at full extent.
    s_full = _round_up(S, 128)
    tile_s = max(128, (target_tile_bytes // bytes_per_col) // 128 * 128)
    tile_s = min(tile_s, s_full)

    # Fold batch elements per step until each step moves ~target_tile_bytes.
    step_bytes = bytes_per_col * tile_s
    tile_b = _largest_divisor_le(B, max(1, target_tile_bytes // max(1, step_bytes)))

    # v7x: 2 TensorCores share the parallel grid -> avoid a size-1 grid if splittable.
    if pl.cdiv(B, tile_b) * pl.cdiv(S, tile_s) == 1:
        if tile_b >= 2:
            tile_b = _largest_divisor_le(B, (tile_b + 1) // 2)
        elif s_full >= 256:
            tile_s = _round_up(pl.cdiv(S, 2), 128)

    grid = (pl.cdiv(B, tile_b), pl.cdiv(S, tile_s))

    gamma2d = gamma.reshape(C, 1)
    beta2d = beta.reshape(C, 1)

    out = pl.pallas_call(
        _layernorm_kernel,
        out_shape=jax.ShapeDtypeStruct((B, C, S), x_nchw.dtype),
        grid_spec=pltpu.PrefetchScalarGridSpec(
            num_scalar_prefetch=0,
            grid=grid,
            in_specs=[
                pl.BlockSpec((tile_b, C, tile_s), lambda b, s: (b, 0, s)),
                pl.BlockSpec((C, 1), lambda b, s: (0, 0)),
                pl.BlockSpec((C, 1), lambda b, s: (0, 0)),
            ],
            out_specs=pl.BlockSpec((tile_b, C, tile_s), lambda b, s: (b, 0, s)),
        ),
        compiler_params=pltpu.CompilerParams(
            dimension_semantics=("parallel", "parallel"),
            vmem_limit_bytes=vmem_limit,
        ),
    )(x, gamma2d, beta2d)

    return out.reshape(orig_shape)


if __name__ == "__main__":
    key = jax.random.PRNGKey(0)
    B, C, H, W = 2, 4, 16, 16
    x = jax.random.normal(key, (B, C, H, W), dtype=jnp.float32)

    # Parameters as in LayerNormNd._init_weights: weight=1, bias=0.
    gamma = jnp.ones((C,), dtype=jnp.float32)
    beta = jnp.zeros((C,), dtype=jnp.float32)

    out = layernorm_nd(x, gamma, beta)
    out = jax.block_until_ready(out)

    # Reference (plain JAX, same math as torch.nn.LayerNorm over the channel axis).
    xt = jnp.transpose(x, (0, 2, 3, 1)).astype(jnp.float32)
    mean = jnp.mean(xt, axis=-1, keepdims=True)
    var = jnp.mean((xt - mean) ** 2, axis=-1, keepdims=True)
    ref = (xt - mean) / jnp.sqrt(var + EPS) * gamma + beta
    ref = jnp.transpose(ref, (0, 3, 1, 2))

    assert out.shape == x.shape
    assert jnp.max(jnp.abs(out - ref)) < 1e-4

    print("KERNEL_OK")
</pallas_src>

<mosaic_0001>
module attributes {stable_mosaic.version = 11 : i64} {
  func.func @_layernorm_kernel(%arg0: i32, %arg1: i32, %arg2: memref<1x4x256xf32, #tpu.memory_space<vmem>>, %arg3: memref<4x1xf32, #tpu.memory_space<vmem>>, %arg4: memref<4x1xf32, #tpu.memory_space<vmem>>, %arg5: memref<1x4x256xf32, #tpu.memory_space<vmem>>) attributes {dimension_semantics = [#tpu.dimension_semantics<parallel>, #tpu.dimension_semantics<parallel>], iteration_bounds = array<i64: 2, 1>, scalar_prefetch = 0 : i64, scratch_operands = 0 : i64, tpu.core_type = #tpu.core_type<tc>, window_params = [{transform_indices = @transform_0, window_bounds = array<i64: 1, 4, 256>}, {pipeline_mode = #tpu.pipeline_mode<synchronous>, transform_indices = @transform_1, window_bounds = array<i64: 4, 1>}, {pipeline_mode = #tpu.pipeline_mode<synchronous>, transform_indices = @transform_2, window_bounds = array<i64: 4, 1>}, {transform_indices = @transform_3, window_bounds = array<i64: 1, 4, 256>}]} {
    %c0 = arith.constant 0 : index
    %c0_0 = arith.constant 0 : index
    %c0_1 = arith.constant 0 : index
    %0 = vector.load %arg2[%c0, %c0_0, %c0_1] : memref<1x4x256xf32, #tpu.memory_space<vmem>>, vector<1x4x256xf32>
    %cst = arith.constant dense<0.000000e+00> : vector<1x256xf32>
    %1 = vector.multi_reduction <add>, %0, %cst [1] : vector<1x4x256xf32> to vector<1x256xf32>
    %2 = vector.shape_cast %1 : vector<1x256xf32> to vector<1x1x256xf32>
    %cst_2 = arith.constant 4.000000e+00 : f32
    %3 = vector.broadcast %cst_2 : f32 to vector<1x1x256xf32>
    %4 = arith.divf %2, %3 : vector<1x1x256xf32>
    %5 = vector.broadcast %4 : vector<1x1x256xf32> to vector<1x4x256xf32>
    %6 = arith.subf %0, %5 : vector<1x4x256xf32>
    %7 = arith.mulf %6, %6 : vector<1x4x256xf32>
    %cst_3 = arith.constant dense<0.000000e+00> : vector<1x256xf32>
    %8 = vector.multi_reduction <add>, %7, %cst_3 [1] : vector<1x4x256xf32> to vector<1x256xf32>
    %9 = vector.shape_cast %8 : vector<1x256xf32> to vector<1x1x256xf32>
    %cst_4 = arith.constant 4.000000e+00 : f32
    %10 = vector.broadcast %cst_4 : f32 to vector<1x1x256xf32>
    %11 = arith.divf %9, %10 : vector<1x1x256xf32>
    %cst_5 = arith.constant 0.000000e+00 : f32
    %12 = vector.broadcast %cst_5 : f32 to vector<1x1x256xf32>
    %13 = arith.maximumf %11, %12 : vector<1x1x256xf32>
    %cst_6 = arith.constant 9.99999974E-6 : f32
    %14 = vector.broadcast %cst_6 : f32 to vector<1x1x256xf32>
    %15 = arith.addf %13, %14 : vector<1x1x256xf32>
    %16 = math.rsqrt %15 : vector<1x1x256xf32>
    %c0_7 = arith.constant 0 : index
    %c0_8 = arith.constant 0 : index
    %17 = vector.load %arg3[%c0_7, %c0_8] : memref<4x1xf32, #tpu.memory_space<vmem>>, vector<4x1xf32>
    %c0_9 = arith.constant 0 : index
    %c0_10 = arith.constant 0 : index
    %18 = vector.load %arg4[%c0_9, %c0_10] : memref<4x1xf32, #tpu.memory_space<vmem>>, vector<4x1xf32>
    %19 = vector.broadcast %16 : vector<1x1x256xf32> to vector<1x4x256xf32>
    %20 = arith.mulf %6, %19 : vector<1x4x256xf32>
    %21 = vector.shape_cast %17 : vector<4x1xf32> to vector<1x4x1xf32>
    %22 = vector.broadcast %21 : vector<1x4x1xf32> to vector<1x4x256xf32>
    %23 = arith.mulf %20, %22 : vector<1x4x256xf32>
    %24 = vector.shape_cast %18 : vector<4x1xf32> to vector<1x4x1xf32>
    %25 = vector.broadcast %24 : vector<1x4x1xf32> to vector<1x4x256xf32>
    %26 = arith.addf %23, %25 : vector<1x4x256xf32>
    %c0_11 = arith.constant 0 : index
    %c0_12 = arith.constant 0 : index
    %c0_13 = arith.constant 0 : index
    %27 = vector.load %arg5[%c0_11, %c0_12, %c0_13] : memref<1x4x256xf32, #tpu.memory_space<vmem>>, vector<1x4x256xf32>
    tpu.vector_store %arg5[%c0_11, %c0_12, %c0_13], %26 {strides = array<i32>} : memref<1x4x256xf32, #tpu.memory_space<vmem>>, vector<1x4x256xf32>,
    return
  }
  func.func @transform_0(%arg0: i32, %arg1: i32) -> (i32, i32, i32) {
    %c0_i32 = arith.constant 0 : i32
    %c0_i32_0 = arith.constant 0 : i32
    return %arg0, %c0_i32, %arg1 : i32, i32, i32
  }
  func.func @transform_1(%arg0: i32, %arg1: i32) -> (i32, i32) {
    %c0_i32 = arith.constant 0 : i32
    %c0_i32_0 = arith.constant 0 : i32
    %c0_i32_1 = arith.constant 0 : i32
    return %c0_i32, %c0_i32_0 : i32, i32
  }
  func.func @transform_2(%arg0: i32, %arg1: i32) -> (i32, i32) {
    %c0_i32 = arith.constant 0 : i32
    %c0_i32_0 = arith.constant 0 : i32
    %c0_i32_1 = arith.constant 0 : i32
    return %c0_i32, %c0_i32_0 : i32, i32
  }
  func.func @transform_3(%arg0: i32, %arg1: i32) -> (i32, i32, i32) {
    %c0_i32 = arith.constant 0 : i32
    %c0_i32_0 = arith.constant 0 : i32
    return %arg0, %c0_i32, %arg1 : i32, i32, i32
  }
}

</mosaic_0001>

<llo_original>
// kernel: layernorm_nd.1
$region0: #{layernorm_nd.1}
  #allocation0 [shape = 'u32[]', space=smem, size = 0x4, offset = 0x4, fixed_abs, tag = 'smem constant byte address 0x4 - core index']
  #allocation1 [shape = 'u32[144,128]{1,0:T(1,128)}', space=vmem, size = 0x12000, scoped, tag = 'internal scratch']
  %s0 = inlined_call_operand.vmem [shape: f32[2,4,256], index: 0, kind: input, shape index: {}]
  %s1 = inlined_call_operand.vmem [shape: f32[4,1], index: 1, kind: input, shape index: {}]
  %s2 = inlined_call_operand.vmem [shape: f32[4,1], index: 2, kind: input, shape index: {}]
  %s3 = inlined_call_operand.vmem [shape: f32[2,4,256], index: 3, kind: output, shape index: {}]
  %s4 = sld [smem:[#allocation0]]
  $region45: #{layernorm_nd.1} parent=0
    _
  %s6 = ssub.s32 1, %s4
  %s7 = scalar_select 0, %s6, %s4
  loop: start=0, step=1, limit=4
  $region2: #{layernorm_nd.1} parent=0 // loop_pre_header
    _
  $region3: #{layernorm_nd.1} parent=0 // loop_header
    %s9 = sphi 0, %s13
    %p10 = scmp.ge.s32.totalorder %s9, 4
    %s16 = sphi 0, %s28
    %s17 = sphi 0, %s24
    %s18 = sphi 0, %s16
    %s19 = sphi 0, %s17
    %s20 = sphi 0, %s18
    %s21 = sphi 0, %s19
    %s33 = sphi 0, %s35
    %s36 = sphi 0, %s33
    %s37 = sphi 0, %s36
    %s53 = sphi 0, %s37
    %s57 = sphi 0, %s57
    %s59 = sphi 0, %s57
    %s60 = sphi 0, %s59
    %s74 = sphi 0, %s60
    %s78 = sphi 0, %s78
    %s80 = sphi 0, %s78
    %s81 = sphi 0, %s80
    %s95 = sphi 0, %s81
    %s103 = sphi 0, %s105
    %s106 = sphi 0, %s103
    %s107 = sphi 0, %s106
    %s123 = sphi 0, %s107
  $region4: #{layernorm_nd.1} parent=0 // loop_header_branch
    %12 = sbr.rel (%p10) target = $region8
  $region5: #{layernorm_nd.1} parent=0 // loop_body
    %s14 = ssub.s32 %s9, 1
    %s15 = ssub.s32 %s9, 2
    %s22 = sadd.s32 1, %s17
    %p23 = scmp.ge.s32.totalorder %s22, 1
    %s24 = scalar_select %p23, 0, %s22
    %s25 = sadd.s32 1, %s16
    %s26 = scalar_select %p23, %s25, %s16
    %p27 = scmp.ge.s32.totalorder %s26, 2
    %s28 = scalar_select %p27, 0, %s26
    %s29 = ssub.s32 %s16, %s28
    %s30 = ssub.s32 %s17, %s24
    %s31 = sor.u32 %s29, %s30
    %p32 = scmp.eq.s32.totalorder %s31, 0
    %s34 = sadd.s32 %s33, 1
    %s35 = scalar_select %p32, %s33, %s34
    %p38 = pneg %p32
    %p39 = scmp.eq.s32.totalorder %s9, 1
    %p40 = por %p38, %p39
    %p41 = scmp.ne.s32.totalorder %s33, %s36
    %p42 = scmp.eq.s32.totalorder %s9, 0
    %p43 = por %p41, %p42
    %p44 = scmp.ne.s32.totalorder %s33, %s36
    %p45 = scmp.eq.s32.totalorder %s14, 1
    %p46 = por %p44, %p45
    %p47 = scmp.ne.s32.totalorder %s36, %s37
    %p48 = scmp.eq.s32.totalorder %s14, 0
    %p49 = por %p47, %p48
    %p50 = scmp.ne.s32.totalorder %s36, %s37
    %p51 = scmp.eq.s32.totalorder %s15, 1
    %p52 = por %p50, %p51
    %p54 = scmp.ne.s32.totalorder %s37, %s53
    %p55 = scmp.eq.s32.totalorder %s15, 0
    %p56 = por %p54, %p55
    %s58 = sadd.s32 %s57, 1
    %p61 = scmp.eq.s32.totalorder %s9, 1
    %p62 = scmp.ne.s32.totalorder %s57, %s59
    %p63 = scmp.eq.s32.totalorder %s9, 0
    %p64 = por %p62, %p63
    %p65 = scmp.ne.s32.totalorder %s57, %s59
    %p66 = scmp.eq.s32.totalorder %s14, 1
    %p67 = por %p65, %p66
    %p68 = scmp.ne.s32.totalorder %s59, %s60
    %p69 = scmp.eq.s32.totalorder %s14, 0
    %p70 = por %p68, %p69
    %p71 = scmp.ne.s32.totalorder %s59, %s60
    %p72 = scmp.eq.s32.totalorder %s15, 1
    %p73 = por %p71, %p72
    %p75 = scmp.ne.s32.totalorder %s60, %s74
    %p76 = scmp.eq.s32.totalorder %s15, 0
    %p77 = por %p75, %p76
    %s79 = sadd.s32 %s78, 1
    %p82 = scmp.eq.s32.totalorder %s9, 1
    %p83 = scmp.ne.s32.totalorder %s78, %s80
    %p84 = scmp.eq.s32.totalorder %s9, 0
    %p85 = por %p83, %p84
    %p86 = scmp.ne.s32.totalorder %s78, %s80
    %p87 = scmp.eq.s32.totalorder %s14, 1
    %p88 = por %p86, %p87
    %p89 = scmp.ne.s32.totalorder %s80, %s81
    %p90 = scmp.eq.s32.totalorder %s14, 0
    %p91 = por %p89, %p90
    %p92 = scmp.ne.s32.totalorder %s80, %s81
    %p93 = scmp.eq.s32.totalorder %s15, 1
    %p94 = por %p92, %p93
    %p96 = scmp.ne.s32.totalorder %s81, %s95
    %p97 = scmp.eq.s32.totalorder %s15, 0
    %p98 = por %p96, %p97
    %s99 = ssub.s32 %s16, %s28
    %s100 = ssub.s32 %s17, %s24
    %s101 = sor.u32 %s99, %s100
    %p102 = scmp.eq.s32.totalorder %s101, 0
    %s104 = sadd.s32 %s103, 1
    %s105 = scalar_select %p102, %s103, %s104
    %p108 = pneg %p102
    %p109 = scmp.eq.s32.totalorder %s9, 1
    %p110 = por %p108, %p109
    %p111 = scmp.ne.s32.totalorder %s103, %s106
    %p112 = scmp.eq.s32.totalorder %s9, 0
    %p113 = por %p111, %p112
    %p114 = scmp.ne.s32.totalorder %s103, %s106
    %p115 = scmp.eq.s32.totalorder %s14, 1
    %p116 = por %p114, %p115
    %p117 = scmp.ne.s32.totalorder %s106, %s107
    %p118 = scmp.eq.s32.totalorder %s14, 0
    %p119 = por %p117, %p118
    %p120 = scmp.ne.s32.totalorder %s106, %s107
    %p121 = scmp.eq.s32.totalorder %s15, 1
    %p122 = por %p120, %p121
    %p124 = scmp.ne.s32.totalorder %s107, %s123
    %p125 = scmp.eq.s32.totalorder %s15, 0
    %p126 = por %p124, %p125
    %p127 = scmp.le.s32.totalorder 1, %s9
    %p128 = scmp.lt.s32.totalorder %s9, 3
    %p129 = pnand %p127, %p128
    %p130 = pneg %p129
    // Predicated region
    $region9: #{layernorm_nd.1} parent=5 // pred_check
      _
    $region10: #{layernorm_nd.1} parent=5 // pred_check_branch
      %132 = sbr.rel (%p129) target = $region12
    $region11: #{layernorm_nd.1} parent=5 // pred_region
      %s133 = ssub.s32 %s9, 1
      // Predicated region
      $region13: #{layernorm_nd.1} parent=11 // pred_check
        %p134 = pneg %p70
      $region14: #{layernorm_nd.1} parent=11 // pred_check_branch
        %136 = sbr.rel (%p134) target = $region16
      $region15: #{layernorm_nd.1} parent=11 // pred_region
        _
      $region16: #{layernorm_nd.1} parent=11 // pred_fallthru
        _
      // Predicated region
      $region17: #{layernorm_nd.1} parent=11 // pred_check
        %p137 = pneg %p91
      $region18: #{layernorm_nd.1} parent=11 // pred_check_branch
        %139 = sbr.rel (%p137) target = $region20
      $region19: #{layernorm_nd.1} parent=11 // pred_region
        _
      $region20: #{layernorm_nd.1} parent=11 // pred_fallthru
        _
    $region12: #{layernorm_nd.1} parent=5 // pred_fallthru
      _
    %p140 = scmp.lt.s32.totalorder %s9, 2
    // Predicated region
    $region21: #{layernorm_nd.1} parent=5 // pred_check
      %p141 = pneg %p140
    $region22: #{layernorm_nd.1} parent=5 // pred_check_branch
      %143 = sbr.rel (%p141) target = $region24
    $region23: #{layernorm_nd.1} parent=5 // pred_region
      // Predicated region
      $region25: #{layernorm_nd.1} parent=23 // pred_check
        %p144 = pneg %p43
      $region26: #{layernorm_nd.1} parent=23 // pred_check_branch
        %146 = sbr.rel (%p144) target = $region28
      $region27: #{layernorm_nd.1} parent=23 // pred_region
        %s147 = smul.u32 2, %s17
        %p148 = scmp.lt.s32.totalorder %s16, 1
        %s149 = scalar_select %p148, %s16, 1
        %p150 = scmp.lt.s32.totalorder %s147, 1
        %s151 = scalar_select %p150, %s147, 1
        %s152 = smul.addr %s149, 2
        %s153 = sadd.s32 %s151, %s152
        %s154 = smul.addr %s153, 4
        %s155 = scalar_lea.vmem %s0, %s154
        %s156 = smul.u32 2, %s17
      $region28: #{layernorm_nd.1} parent=23 // pred_fallthru
        _
    $region24: #{layernorm_nd.1} parent=5 // pred_fallthru
      _
    %p157 = scmp.le.s32.totalorder 1, %s9
    %p158 = scmp.lt.s32.totalorder %s9, 3
    %p159 = pnand %p157, %p158
    %p160 = pneg %p159
    // Predicated region
    $region29: #{layernorm_nd.1} parent=5 // pred_check
      _
    $region30: #{layernorm_nd.1} parent=5 // pred_check_branch
      %162 = sbr.rel (%p159) target = $region32
    $region31: #{layernorm_nd.1} parent=5 // pred_region
      %s163 = ssub.s32 %s9, 1
      %s164 = smul.u32 2, %s19
      %p165 = scmp.lt.s32.totalorder %s18, 1
      %s166 = scalar_select %p165, %s18, 1
      %p167 = scmp.lt.s32.totalorder %s164, 1
      %s168 = scalar_select %p167, %s164, 1
      %s169 = smul.addr %s166, 2
      %s170 = sadd.s32 %s168, %s169
      %s171 = smul.addr %s170, 4
      %s172 = scalar_lea.vmem %s0, %s171
      %p173 = pneg %p49
      %p174 = pneg %p46
      %p175 = pneg %p70
      %p176 = pneg %p67
      %p177 = pneg %p91
      %p178 = pneg %p88
      %p179 = pneg %p119
      %p180 = pneg %p116
      %s181 = smul.u32 2, %s19
      %p182 = scmp.lt.s32.totalorder %s18, 1
      %s183 = scalar_select %p182, %s18, 1
      %p184 = scmp.lt.s32.totalorder %s181, 1
      %s185 = scalar_select %p184, %s181, 1
      %s186 = smul.addr %s183, 2
      %s187 = sadd.s32 %s185, %s186
      %s188 = smul.addr %s187, 4
      %s189 = scalar_lea.vmem %s3, %s188
      %s190 = smul.u32 2, %s19
      %p191 = scmp.lt.s32.totalorder %s18, 1
      %s192 = scalar_select %p191, %s18, 1
      %p193 = scmp.lt.s32.totalorder %s190, 1
      %s194 = scalar_select %p193, %s190, 1
      %s195 = smul.addr %s192, 2
      %s196 = sadd.s32 %s194, %s195
      %s197 = smul.addr %s196, 4
      %s198 = scalar_lea.vmem %s0, %s197
      %s199 = smul.u32 2, %s19
      %s200 = smul.u32 2, %s19
      %p201 = scmp.lt.s32.totalorder %s18, 1
      %s202 = scalar_select %p201, %s18, 1
      %p203 = scmp.lt.s32.totalorder %s200, 1
      %s204 = scalar_select %p203, %s200, 1
      %s205 = smul.addr %s202, 2
      %s206 = sadd.s32 %s204, %s205
      %s207 = smul.addr %s206, 4
      %s208 = scalar_lea.vmem %s3, %s207
      %s209 = smul.u32 2, %s19
      %v210 = vld [vmem:[%s198] sm:$0xff]
      %v212 = vcombine.high %v210, %v210
      %vm214 = vcmask 1043456
      %v215 = vsel %vm214, %v210, 0.0
      %v216 = vrot.slane %v215, 4
      %v217 = vadd.f32 %v215, %v216
      %v218 = vrot.slane %v217, 2
      %v219 = vadd.f32 %v217, %v218
      %v220 = vrot.slane %v219, 1
      %v221 = vadd.f32 %v219, %v220
      %v222 = vsel %vm214, %v212, 0.0
      %v223 = vrot.slane %v222, 4
      %v224 = vadd.f32 %v222, %v223
      %v225 = vrot.slane %v224, 2
      %v226 = vadd.f32 %v224, %v225
      %v227 = vrot.slane %v226, 1
      %v228 = vadd.f32 %v226, %v227
      %v229 = vrcp.pop 4.0
      %v230 = vmul.f32 %v221, %v229
      %v231 = vmul.f32 %v228, %v229
      %v234 = vcombine.low %v230, %v231
      %v236 = vsub.f32 %v210, %v234
      %v237 = vmul.f32 %v236, %v236
      %v239 = vcombine.high %v237, %v237
      %v241 = vsel %vm214, %v237, 0.0
      %v242 = vrot.slane %v241, 4
      %v243 = vadd.f32 %v241, %v242
      %v244 = vrot.slane %v243, 2
      %v245 = vadd.f32 %v243, %v244
      %v246 = vrot.slane %v245, 1
      %v247 = vadd.f32 %v245, %v246
      %v248 = vsel %vm214, %v239, 0.0
      %v249 = vrot.slane %v248, 4
      %v250 = vadd.f32 %v248, %v249
      %v251 = vrot.slane %v250, 2
      %v252 = vadd.f32 %v250, %v251
      %v253 = vrot.slane %v252, 1
      %v254 = vadd.f32 %v252, %v253
      %v255 = vmul.f32 %v247, %v229
      %v256 = vmul.f32 %v254, %v229
      %v257 = vmax.f32 %v255, 0.0
      %v258 = vmax.f32 %v256, 0.0
      %v259 = vadd.f32 %v257, 1e-05
      %v260 = vadd.f32 %v258, 1e-05
      %v261 = vrsqrt.pop %v259
      %v262 = vrsqrt.pop %v260
      %v263 = vld [vmem:[%s1] sm:$0xf]
      %v264 = vld [vmem:[%s2] sm:$0xf]
      %v267 = vcombine.low %v261, %v262
      %v269 = vmul.f32 %v236, %v267
      %271 = vset.pattern.permute.xlu0 0
      %272 = vperm.xlu0 %271, %v263
      %v273 = vpop.permute.xlu0 %272
      %v275 = vunpack.c.l.s4 839922192
      %v276 = vunpack.c.0.s8 %v275
      %v277 = vlaneseq
      %v278 = vshrl.u32 %v277, 7
      %v279 = vsub.s32 %v276, %v278
      %v280 = vrot.slane %v273, %v279
      %v282 = vmul.f32 %v269, %v280
      %284 = vset.pattern.permute.xlu0 0
      %285 = vperm.xlu0 %284, %v264
      %v286 = vpop.permute.xlu0 %285
      %v288 = vunpack.c.l.s4 839922192
      %v289 = vunpack.c.0.s8 %v288
      %v290 = vlaneseq
      %v291 = vshrl.u32 %v290, 7
      %v292 = vsub.s32 %v289, %v291
      %v293 = vrot.slane %v286, %v292
      %v295 = vadd.f32 %v282, %v293
      %296 = vst [vmem:[%s208] sm:$0xff] %v295
      %s297 = smul.u32 2, %s19
      %p298 = scmp.lt.s32.totalorder %s18, 1
      %s299 = scalar_select %p298, %s18, 1
      %p300 = scmp.lt.s32.totalorder %s297, 1
      %s301 = scalar_select %p300, %s297, 1
      %s302 = smul.addr %s299, 2
      %s303 = sadd.s32 %s301, %s302
      %s304 = smul.addr %s303, 4
      %s305 = scalar_lea.vmem %s3, %s304
      // Predicated region
      $region33: #{layernorm_nd.1} parent=31 // pred_check
        %p306 = pneg %p116
      $region34: #{layernorm_nd.1} parent=31 // pred_check_branch
        %308 = sbr.rel (%p306) target = $region36
      $region35: #{layernorm_nd.1} parent=31 // pred_region
        %s309 = smul.u32 2, %s19
      $region36: #{layernorm_nd.1} parent=31 // pred_fallthru
        _
    $region32: #{layernorm_nd.1} parent=5 // pred_fallthru
      _
    %p310 = scmp.le.s32.totalorder 2, %s9
    // Predicated region
    $region37: #{layernorm_nd.1} parent=5 // pred_check
      %p311 = pneg %p310
    $region38: #{layernorm_nd.1} parent=5 // pred_check_branch
      %313 = sbr.rel (%p311) target = $region40
    $region39: #{layernorm_nd.1} parent=5 // pred_region
      %s314 = ssub.s32 %s9, 2
      // Predicated region
      $region41: #{layernorm_nd.1} parent=39 // pred_check
        %p315 = pneg %p122
      $region42: #{layernorm_nd.1} parent=39 // pred_check_branch
        %317 = sbr.rel (%p315) target = $region44
      $region43: #{layernorm_nd.1} parent=39 // pred_region
        %s318 = smul.u32 2, %s21
        %p319 = scmp.lt.s32.totalorder %s20, 1
        %s320 = scalar_select %p319, %s20, 1
        %p321 = scmp.lt.s32.totalorder %s318, 1
        %s322 = scalar_select %p321, %s318, 1
        %s323 = smul.addr %s320, 2
        %s324 = sadd.s32 %s322, %s323
        %s325 = smul.addr %s324, 4
        %s326 = scalar_lea.vmem %s3, %s325
      $region44: #{layernorm_nd.1} parent=39 // pred_fallthru
        _
    $region40: #{layernorm_nd.1} parent=5 // pred_fallthru
      _
  $region6: #{layernorm_nd.1} parent=0 // loop_footer
    %s13 = sadd.s32 1, %s9
  $region7: #{layernorm_nd.1} parent=0 // loop_footer_branch
    %8 = sbr.rel target = $region3
  $region8: #{layernorm_nd.1} parent=0 // loop_exit
    _

</llo_original>
